<compile_context>
chip_gen: v5e
topology: v5e:2x2
jax: 0.10.0
libtpu: 0.0.40
codegen_flags: <defaults>
</compile_context>

<pallas_src>
import functools

import jax
import jax.numpy as jnp
from jax.experimental import pallas as pl
from jax.experimental.pallas import tpu as pltpu


def _round_up(x, m):
    return (x + m - 1) // m * m


# --------------------------------------------------------------------------
# Pallas kernel: output-head matmul (logits tile).
# --------------------------------------------------------------------------
def _head_kernel(x_ref, w_ref, o_ref):
    # x_ref: (tm, E) bf16    w_ref: (E, tv) bf16    o_ref: (tm, tv) f32
    o_ref[...] = jnp.dot(
        x_ref[...], w_ref[...], preferred_element_type=jnp.float32
    ).astype(o_ref.dtype)


def gpt_head_pallas(x, w_out_t, *, tm=256, tv=2048):
    """x: (M, E) bf16, w_out_t: (E, V) bf16 -> logits (M, V) f32."""
    M, E = x.shape
    _, V = w_out_t.shape

    # Clamp tiles to the (padded) problem size; keep the lane axis 128-aligned
    # and the sublane axis 8-aligned so stores stay wide and unmasked.
    tm = min(tm, _round_up(M, 8))
    tv = min(tv, _round_up(V, 128))
    Mp = _round_up(M, tm)
    Vp = _round_up(V, tv)

    if Mp != M:
        x = jnp.pad(x, ((0, Mp - M), (0, 0)))
    if Vp != V:
        w_out_t = jnp.pad(w_out_t, ((0, 0), (0, Vp - V)))

    # V outer, M inner: the (E, tv) weight block index is constant across the
    # inner M sweep, so it is fetched once per j instead of once per (i, j).
    grid = (Vp // tv, Mp // tm)

    itm = jnp.dtype(x.dtype).itemsize
    cost = pl.CostEstimate(
        flops=2 * Mp * E * Vp,
        transcendentals=0,
        bytes_accessed=E * Vp * itm + Mp * E * itm + Mp * Vp * 4,
    )

    out = pl.pallas_call(
        _head_kernel,
        out_shape=jax.ShapeDtypeStruct((Mp, Vp), jnp.float32),
        grid_spec=pltpu.PrefetchScalarGridSpec(
            num_scalar_prefetch=0,
            grid=grid,
            in_specs=[
                pl.BlockSpec((tm, E), lambda j, i: (i, 0)),   # activation tile
                pl.BlockSpec((E, tv), lambda j, i: (0, j)),   # weight tile (resident over i)
            ],
            out_specs=pl.BlockSpec((tm, tv), lambda j, i: (i, j)),
        ),
        compiler_params=pltpu.CompilerParams(
            dimension_semantics=("parallel", "parallel")
        ),
        cost_estimate=cost,
    )(x, w_out_t)

    if Mp != M or Vp != V:
        out = out[:M, :V]
    return out


# --------------------------------------------------------------------------
# Model wrapper (parameter init + glue).
# --------------------------------------------------------------------------
def init_params(config, key):
    k_tok, k_pos, k_out = jax.random.split(key, 3)
    V, E, C = config["vocab_size"], config["emb_dim"], config["context_length"]
    tok_emb = jax.random.normal(k_tok, (V, E), dtype=jnp.float32)
    pos_emb = jax.random.normal(k_pos, (C, E), dtype=jnp.float32)
    # nn.Linear(E, V, bias=False).weight has shape (V, E); store transposed (E, V).
    bound = 1.0 / (E ** 0.5)
    w_out_t = jax.random.uniform(
        k_out, (E, V), dtype=jnp.float32, minval=-bound, maxval=bound
    )
    return {
        "tok_emb": tok_emb,
        "pos_emb": pos_emb,
        "w_out_t": w_out_t,                              # f32 spec weight
        "w_out_t_bf16": w_out_t.astype(jnp.bfloat16),    # pre-cast matmul operand
    }


@jax.jit
def simple_gpt_forward(params, in_idx):
    B, T = in_idx.shape
    E = params["tok_emb"].shape[1]
    V = params["w_out_t"].shape[1]

    # Embedding gathers + pos add in f32 (XLA fuses the add into the gather;
    # no broadcast_to materialization of pos).
    # TODO(synk): for very large B*T, fuse the row gather into the kernel via
    # scalar prefetch + pl.Element; not worth it next to the weight stream here.
    tok = params["tok_emb"][in_idx]                      # (B, T, E)
    pos = params["pos_emb"][:T]                          # (T, E)
    x = tok + pos[None, :, :]                            # (B, T, E) f32

    # Cast once to bf16 for the MXU (accumulation stays f32 in-kernel).
    x_bf16 = x.reshape(B * T, E).astype(jnp.bfloat16)

    # TODO(synk): drop_emb / trf_blocks / final_norm are identity in the
    # reference module, so there is nothing to compute for them.
    logits_flat = gpt_head_pallas(x_bf16, params["w_out_t_bf16"])
    return logits_flat.reshape(B, T, V)


# --------------------------------------------------------------------------
# Pure-JAX references for validation.
# --------------------------------------------------------------------------
def simple_gpt_ref_bf16(params, in_idx):
    """Mirrors the kernel's bf16-operand / f32-accumulate matmul."""
    B, T = in_idx.shape
    tok = params["tok_emb"][in_idx]
    pos = params["pos_emb"][:T]
    x = (tok + pos[None, :, :]).astype(jnp.bfloat16)
    return jnp.einsum(
        "bte,ev->btv", x, params["w_out_t_bf16"],
        preferred_element_type=jnp.float32,
    )


def simple_gpt_ref_f32(params, in_idx):
    """Full-f32 reference of the original module semantics."""
    B, T = in_idx.shape
    tok = params["tok_emb"][in_idx]
    pos = params["pos_emb"][:T]
    x = tok + pos[None, :, :]
    return jnp.einsum("bte,ev->btv", x, params["w_out_t"])


if __name__ == "__main__":
    key = jax.random.PRNGKey(0)

    # --- Test 1: small config, tile-aligned shapes -------------------------
    config = {
        "vocab_size": 512,
        "context_length": 64,
        "emb_dim": 128,
        "n_heads": 4,
        "n_layers": 2,
        "drop_rate": 0.1,
        "qkv_bias": False,
    }
    k_params, k_idx, k2_params, k2_idx = jax.random.split(key, 4)
    params = init_params(config, k_params)

    B, T = 2, 16
    in_idx = jax.random.randint(
        k_idx, (B, T), minval=0, maxval=config["vocab_size"], dtype=jnp.int32
    )

    logits = jax.block_until_ready(simple_gpt_forward(params, in_idx))
    assert logits.shape == (B, T, config["vocab_size"])
    assert jnp.allclose(logits, simple_gpt_ref_bf16(params, in_idx),
                        atol=1e-3, rtol=1e-3)
    assert jnp.allclose(logits, simple_gpt_ref_f32(params, in_idx),
                        atol=6e-2, rtol=6e-2)

    # --- Test 2: non-multiple M and V (exercises the padding path) ---------
    config2 = dict(config, vocab_size=1000, context_length=32)
    params2 = init_params(config2, k2_params)
    B2, T2 = 3, 12
    in_idx2 = jax.random.randint(
        k2_idx, (B2, T2), minval=0, maxval=config2["vocab_size"], dtype=jnp.int32
    )
    logits2 = jax.block_until_ready(simple_gpt_forward(params2, in_idx2))
    assert logits2.shape == (B2, T2, config2["vocab_size"])
    assert jnp.allclose(logits2, simple_gpt_ref_bf16(params2, in_idx2),
                        atol=1e-3, rtol=1e-3)

    print("KERNEL_OK")
</pallas_src>

<mosaic_0001>
module attributes {stable_mosaic.version = 11 : i64} {
  func.func @_head_kernel(%arg0: i32, %arg1: i32, %arg2: memref<32x128xbf16, #tpu.memory_space<vmem>>, %arg3: memref<128x512xbf16, #tpu.memory_space<vmem>>, %arg4: memref<32x512xf32, #tpu.memory_space<vmem>>) attributes {dimension_semantics = [#tpu.dimension_semantics<parallel>, #tpu.dimension_semantics<parallel>], iteration_bounds = array<i64: 1, 1>, scalar_prefetch = 0 : i64, scratch_operands = 0 : i64, tpu.core_type = #tpu.core_type<tc>, window_params = [{transform_indices = @transform_0, window_bounds = array<i64: 32, 128>}, {transform_indices = @transform_1, window_bounds = array<i64: 128, 512>}, {transform_indices = @transform_2, window_bounds = array<i64: 32, 512>}]} {
    %c0 = arith.constant 0 : index
    %c0_0 = arith.constant 0 : index
    %0 = vector.load %arg2[%c0, %c0_0] : memref<32x128xbf16, #tpu.memory_space<vmem>>, vector<32x128xbf16>
    %c0_1 = arith.constant 0 : index
    %c0_2 = arith.constant 0 : index
    %1 = vector.load %arg3[%c0_1, %c0_2] : memref<128x512xbf16, #tpu.memory_space<vmem>>, vector<128x512xbf16>
    %cst = arith.constant dense<0.000000e+00> : vector<32x512xf32>
    %2 = tpu.matmul %0, %1, %cst {dimension_numbers = #tpu.dot_dimension_numbers<[1], [0], [0], [1], [0, 0, 1, 1], [], []>} : vector<32x128xbf16>, vector<128x512xbf16>, vector<32x512xf32> -> vector<32x512xf32>
    %c0_3 = arith.constant 0 : index
    %c0_4 = arith.constant 0 : index
    %3 = vector.load %arg4[%c0_3, %c0_4] : memref<32x512xf32, #tpu.memory_space<vmem>>, vector<32x512xf32>
    tpu.vector_store %arg4[%c0_3, %c0_4], %2 {strides = array<i32>} : memref<32x512xf32, #tpu.memory_space<vmem>>, vector<32x512xf32>,
    return
  }
  func.func @transform_0(%arg0: i32, %arg1: i32) -> (i32, i32) {
    %c0_i32 = arith.constant 0 : i32
    %c0_i32_0 = arith.constant 0 : i32
    return %arg1, %c0_i32 : i32, i32
  }
  func.func @transform_1(%arg0: i32, %arg1: i32) -> (i32, i32) {
    %c0_i32 = arith.constant 0 : i32
    %c0_i32_0 = arith.constant 0 : i32
    return %c0_i32, %arg0 : i32, i32
  }
  func.func @transform_2(%arg0: i32, %arg1: i32) -> (i32, i32) {
    %c0_i32 = arith.constant 0 : i32
    return %arg1, %arg0 : i32, i32
  }
}

</mosaic_0001>

<llo_original>
// kernel: simple_gpt_forward.1
$region0: #{simple_gpt_forward.1}
  #allocation0 [shape = 'u32[]', space=smem, size = 0x4, offset = 0x4, fixed_abs, tag = 'smem constant byte address 0x4 - core index']
  #allocation1 [shape = 'u32[72,128]{1,0:T(1,128)}', space=vmem, size = 0x9000, scoped, tag = 'internal scratch']
  %s0 = inlined_call_operand.vmem [shape: bf16[32,128], index: 0, kind: input, shape index: {}]
  %s1 = inlined_call_operand.vmem [shape: bf16[128,512], index: 1, kind: input, shape index: {}]
  %s2 = inlined_call_operand.hbm [shape: f32[32,512], index: 2, kind: output, shape index: {}]
  %s3 = sld [smem:[#allocation0]]
  $region18: #{simple_gpt_forward.1} parent=0
    _
  %s5 = ssub.s32 1, %s3
  %s6 = scalar_select 0, %s5, %s3
  $region1: #{simple_gpt_forward.1} parent=0
    #allocation2 [shape = 'u8[65536]{0}', space=vmem, size = 0x10000, scoped, tag = 'output window, operand 0, single buffered']
    #allocation3 [shape = 's32[1]{0}', space=sflag, size = 0x4, scoped, tag = 'scoped memory for simple_gpt_forward.1']
    %7 = vsyncpa [#allocation3], 0
    // Predicated region
    $region2: #{simple_gpt_forward.1} parent=1 // pred_check
      _
    $region3: #{simple_gpt_forward.1} parent=1 // pred_check_branch
      %9 = sbr.rel (0) target = $region5
    $region4: #{simple_gpt_forward.1} parent=1 // pred_region
      _
    $region5: #{simple_gpt_forward.1} parent=1 // pred_fallthru
      _
    // Predicated region
    $region6: #{simple_gpt_forward.1} parent=1 // pred_check
      _
    $region7: #{simple_gpt_forward.1} parent=1 // pred_check_branch
      %11 = sbr.rel (0) target = $region9
    $region8: #{simple_gpt_forward.1} parent=1 // pred_region
      _
    $region9: #{simple_gpt_forward.1} parent=1 // pred_fallthru
      _
    %v12 = vld [vmem:[%s0] sm:$0xf]
    %v13 = vld [vmem:[%s0 + $0x4] sm:$0xf]
    %v14 = vld [vmem:[%s0 + $0x8] sm:$0xf]
    %v15 = vld [vmem:[%s0 + $0xc] sm:$0xf]
    %v16 = vld [vmem:[%s1] sm:$0xff]
    %v17 = vld [vmem:[%s1 + $0x8] sm:$0xff]
    %v18 = vld [vmem:[%s1 + $0x10] sm:$0xff]
    %v19 = vld [vmem:[%s1 + $0x18] sm:$0xff]
    %v20 = vld [vmem:[%s1 + $0x20] sm:$0xff]
    %v21 = vld [vmem:[%s1 + $0x28] sm:$0xff]
    %v22 = vld [vmem:[%s1 + $0x30] sm:$0xff]
    %v23 = vld [vmem:[%s1 + $0x38] sm:$0xff]
    %v24 = vld [vmem:[%s1 + $0x40] sm:$0xff]
    %v25 = vld [vmem:[%s1 + $0x48] sm:$0xff]
    %v26 = vld [vmem:[%s1 + $0x50] sm:$0xff]
    %v27 = vld [vmem:[%s1 + $0x58] sm:$0xff]
    %v28 = vld [vmem:[%s1 + $0x60] sm:$0xff]
    %v29 = vld [vmem:[%s1 + $0x68] sm:$0xff]
    %v30 = vld [vmem:[%s1 + $0x70] sm:$0xff]
    %v31 = vld [vmem:[%s1 + $0x78] sm:$0xff]
    %v32 = vld [vmem:[%s1 + $0x80] sm:$0xff]
    %v33 = vld [vmem:[%s1 + $0x88] sm:$0xff]
    %v34 = vld [vmem:[%s1 + $0x90] sm:$0xff]
    %v35 = vld [vmem:[%s1 + $0x98] sm:$0xff]
    %v36 = vld [vmem:[%s1 + $0xa0] sm:$0xff]
    %v37 = vld [vmem:[%s1 + $0xa8] sm:$0xff]
    %v38 = vld [vmem:[%s1 + $0xb0] sm:$0xff]
    %v39 = vld [vmem:[%s1 + $0xb8] sm:$0xff]
    %v40 = vld [vmem:[%s1 + $0xc0] sm:$0xff]
    %v41 = vld [vmem:[%s1 + $0xc8] sm:$0xff]
    %v42 = vld [vmem:[%s1 + $0xd0] sm:$0xff]
    %v43 = vld [vmem:[%s1 + $0xd8] sm:$0xff]
    %v44 = vld [vmem:[%s1 + $0xe0] sm:$0xff]
    %v45 = vld [vmem:[%s1 + $0xe8] sm:$0xff]
    %v46 = vld [vmem:[%s1 + $0xf0] sm:$0xff]
    %v47 = vld [vmem:[%s1 + $0xf8] sm:$0xff]
    %v52 = vunpack.c.l.b16 %v12
    %v53 = vunpack.c.l.b16 %v13
    %v54 = vunpack.c.l.b16 %v14
    %v55 = vunpack.c.l.b16 %v15
    %v56 = vpack.c.b16 %v53, %v52
    %v57 = vpack.c.b16 %v55, %v54
    %v92 = vunpack.c.l.b16 %v16
    %v93 = vunpack.c.h.b16 %v16
    %v94 = vunpack.c.l.b16 %v17
    %v95 = vunpack.c.h.b16 %v17
    %v96 = vunpack.c.l.b16 %v18
    %v97 = vunpack.c.h.b16 %v18
    %v98 = vunpack.c.l.b16 %v19
    %v99 = vunpack.c.h.b16 %v19
    %v100 = vunpack.c.l.b16 %v20
    %v101 = vunpack.c.h.b16 %v20
    %v102 = vunpack.c.l.b16 %v21
    %v103 = vunpack.c.h.b16 %v21
    %v104 = vunpack.c.l.b16 %v22
    %v105 = vunpack.c.h.b16 %v22
    %v106 = vunpack.c.l.b16 %v23
    %v107 = vunpack.c.h.b16 %v23
    %v108 = vunpack.c.l.b16 %v24
    %v109 = vunpack.c.h.b16 %v24
    %v110 = vunpack.c.l.b16 %v25
    %v111 = vunpack.c.h.b16 %v25
    %v112 = vunpack.c.l.b16 %v26
    %v113 = vunpack.c.h.b16 %v26
    %v114 = vunpack.c.l.b16 %v27
    %v115 = vunpack.c.h.b16 %v27
    %v116 = vunpack.c.l.b16 %v28
    %v117 = vunpack.c.h.b16 %v28
    %v118 = vunpack.c.l.b16 %v29
    %v119 = vunpack.c.h.b16 %v29
    %v120 = vunpack.c.l.b16 %v30
    %v121 = vunpack.c.h.b16 %v30
    %v122 = vunpack.c.l.b16 %v31
    %v123 = vunpack.c.h.b16 %v31
    %v124 = vunpack.c.l.b16 %v32
    %v125 = vunpack.c.h.b16 %v32
    %v126 = vunpack.c.l.b16 %v33
    %v127 = vunpack.c.h.b16 %v33
    %v128 = vunpack.c.l.b16 %v34
    %v129 = vunpack.c.h.b16 %v34
    %v130 = vunpack.c.l.b16 %v35
    %v131 = vunpack.c.h.b16 %v35
    %v132 = vunpack.c.l.b16 %v36
    %v133 = vunpack.c.h.b16 %v36
    %v134 = vunpack.c.l.b16 %v37
    %v135 = vunpack.c.h.b16 %v37
    %v136 = vunpack.c.l.b16 %v38
    %v137 = vunpack.c.h.b16 %v38
    %v138 = vunpack.c.l.b16 %v39
    %v139 = vunpack.c.h.b16 %v39
    %v140 = vunpack.c.l.b16 %v40
    %v141 = vunpack.c.h.b16 %v40
    %v142 = vunpack.c.l.b16 %v41
    %v143 = vunpack.c.h.b16 %v41
    %v144 = vunpack.c.l.b16 %v42
    %v145 = vunpack.c.h.b16 %v42
    %v146 = vunpack.c.l.b16 %v43
    %v147 = vunpack.c.h.b16 %v43
    %v148 = vunpack.c.l.b16 %v44
    %v149 = vunpack.c.h.b16 %v44
    %v150 = vunpack.c.l.b16 %v45
    %v151 = vunpack.c.h.b16 %v45
    %v152 = vunpack.c.l.b16 %v46
    %v153 = vunpack.c.h.b16 %v46
    %v154 = vunpack.c.l.b16 %v47
    %v155 = vunpack.c.h.b16 %v47
    %v156 = vpack.c.b16 %v96, %v92
    %v157 = vpack.c.b16 %v97, %v93
    %v158 = vpack.c.b16 %v98, %v94
    %v159 = vpack.c.b16 %v99, %v95
    %v160 = vpack.c.b16 %v104, %v100
    %v161 = vpack.c.b16 %v105, %v101
    %v162 = vpack.c.b16 %v106, %v102
    %v163 = vpack.c.b16 %v107, %v103
    %v164 = vpack.c.b16 %v112, %v108
    %v165 = vpack.c.b16 %v113, %v109
    %v166 = vpack.c.b16 %v114, %v110
    %v167 = vpack.c.b16 %v115, %v111
    %v168 = vpack.c.b16 %v120, %v116
    %v169 = vpack.c.b16 %v121, %v117
    %v170 = vpack.c.b16 %v122, %v118
    %v171 = vpack.c.b16 %v123, %v119
    %v172 = vpack.c.b16 %v128, %v124
    %v173 = vpack.c.b16 %v129, %v125
    %v174 = vpack.c.b16 %v130, %v126
    %v175 = vpack.c.b16 %v131, %v127
    %v176 = vpack.c.b16 %v136, %v132
    %v177 = vpack.c.b16 %v137, %v133
    %v178 = vpack.c.b16 %v138, %v134
    %v179 = vpack.c.b16 %v139, %v135
    %v180 = vpack.c.b16 %v144, %v140
    %v181 = vpack.c.b16 %v145, %v141
    %v182 = vpack.c.b16 %v146, %v142
    %v183 = vpack.c.b16 %v147, %v143
    %v184 = vpack.c.b16 %v152, %v148
    %v185 = vpack.c.b16 %v153, %v149
    %v186 = vpack.c.b16 %v154, %v150
    %v187 = vpack.c.b16 %v155, %v151
    %220 = vmatpush.bf16.msra.mxu0 %v184
    %221 = vmatpush.bf16.msra.mxu0 %v180
    %222 = vmatpush.bf16.msra.mxu0 %v176
    %223 = vmatpush.bf16.msra.mxu0 %v172
    %224 = vmatpush.bf16.msra.mxu0 %v168
    %225 = vmatpush.bf16.msra.mxu0 %v164
    %226 = vmatpush.bf16.msra.mxu0 %v160
    %227 = vmatpush.bf16.msra.mxu0 %v156
    %228 = vmatmul.bf16.gmra.mxu0 %v56
    %v229 = vpop.f32.mrf.mxu0
    %v230 = vadd.f32 0.0, %v229
    %v231 = vpop.f32.mrf.mxu0
    %v232 = vadd.f32 0.0, %v231
    %233 = vmatmul.bf16.gmra.mxu0 %v57
    %v234 = vpop.f32.mrf.mxu0
    %v235 = vadd.f32 0.0, %v234
    %v236 = vpop.f32.mrf.mxu0
    %v237 = vadd.f32 0.0, %v236
    %238 = vdwg.mxu0
    %239 = vmatpush.bf16.msra.mxu0 %v185
    %240 = vmatpush.bf16.msra.mxu0 %v181
    %241 = vmatpush.bf16.msra.mxu0 %v177
    %242 = vmatpush.bf16.msra.mxu0 %v173
    %243 = vmatpush.bf16.msra.mxu0 %v169
    %244 = vmatpush.bf16.msra.mxu0 %v165
    %245 = vmatpush.bf16.msra.mxu0 %v161
    %246 = vmatpush.bf16.msra.mxu0 %v157
    %247 = vmatmul.bf16.gmra.mxu0 %v56
    %v248 = vpop.f32.mrf.mxu0
    %v249 = vadd.f32 0.0, %v248
    %v250 = vpop.f32.mrf.mxu0
    %v251 = vadd.f32 0.0, %v250
    %252 = vmatmul.bf16.gmra.mxu0 %v57
    %v253 = vpop.f32.mrf.mxu0
    %v254 = vadd.f32 0.0, %v253
    %v255 = vpop.f32.mrf.mxu0
    %v256 = vadd.f32 0.0, %v255
    %257 = vdwg.mxu0
    %258 = vmatpush.bf16.msra.mxu0 %v186
    %259 = vmatpush.bf16.msra.mxu0 %v182
    %260 = vmatpush.bf16.msra.mxu0 %v178
    %261 = vmatpush.bf16.msra.mxu0 %v174
    %262 = vmatpush.bf16.msra.mxu0 %v170
    %263 = vmatpush.bf16.msra.mxu0 %v166
    %264 = vmatpush.bf16.msra.mxu0 %v162
    %265 = vmatpush.bf16.msra.mxu0 %v158
    %266 = vmatmul.bf16.gmra.mxu0 %v56
    %v267 = vpop.f32.mrf.mxu0
    %v268 = vadd.f32 0.0, %v267
    %v269 = vpop.f32.mrf.mxu0
    %v270 = vadd.f32 0.0, %v269
    %271 = vmatmul.bf16.gmra.mxu0 %v57
    %v272 = vpop.f32.mrf.mxu0
    %v273 = vadd.f32 0.0, %v272
    %v274 = vpop.f32.mrf.mxu0
    %v275 = vadd.f32 0.0, %v274
    %276 = vdwg.mxu0
    %277 = vmatpush.bf16.msra.mxu0 %v187
    %278 = vmatpush.bf16.msra.mxu0 %v183
    %279 = vmatpush.bf16.msra.mxu0 %v179
    %280 = vmatpush.bf16.msra.mxu0 %v175
    %281 = vmatpush.bf16.msra.mxu0 %v171
    %282 = vmatpush.bf16.msra.mxu0 %v167
    %283 = vmatpush.bf16.msra.mxu0 %v163
    %284 = vmatpush.bf16.msra.mxu0 %v159
    %285 = vmatmul.bf16.gmra.mxu0 %v56
    %v286 = vpop.f32.mrf.mxu0
    %v287 = vadd.f32 0.0, %v286
    %v288 = vpop.f32.mrf.mxu0
    %v289 = vadd.f32 0.0, %v288
    %290 = vmatmul.bf16.gmra.mxu0 %v57
    %v291 = vpop.f32.mrf.mxu0
    %v292 = vadd.f32 0.0, %v291
    %v293 = vpop.f32.mrf.mxu0
    %v294 = vadd.f32 0.0, %v293
    %295 = vdwg.mxu0
    %296 = vst [vmem:[#allocation2] sm:$0xff] %v230
    %297 = vst [vmem:[#allocation2 + $0x8] sm:$0xff] %v249
    %298 = vst [vmem:[#allocation2 + $0x10] sm:$0xff] %v268
    %299 = vst [vmem:[#allocation2 + $0x18] sm:$0xff] %v287
    %300 = vst [vmem:[#allocation2 + $0x20] sm:$0xff] %v232
    %301 = vst [vmem:[#allocation2 + $0x28] sm:$0xff] %v251
    %302 = vst [vmem:[#allocation2 + $0x30] sm:$0xff] %v270
    %303 = vst [vmem:[#allocation2 + $0x38] sm:$0xff] %v289
    %304 = vst [vmem:[#allocation2 + $0x40] sm:$0xff] %v235
    %305 = vst [vmem:[#allocation2 + $0x48] sm:$0xff] %v254
    %306 = vst [vmem:[#allocation2 + $0x50] sm:$0xff] %v273
    %307 = vst [vmem:[#allocation2 + $0x58] sm:$0xff] %v292
    %308 = vst [vmem:[#allocation2 + $0x60] sm:$0xff] %v237
    %309 = vst [vmem:[#allocation2 + $0x68] sm:$0xff] %v256
    %310 = vst [vmem:[#allocation2 + $0x70] sm:$0xff] %v275
    %311 = vst [vmem:[#allocation2 + $0x78] sm:$0xff] %v294
    // Predicated region
    $region10: #{simple_gpt_forward.1} parent=1 // pred_check
      _
    $region11: #{simple_gpt_forward.1} parent=1 // pred_check_branch
      %313 = sbr.rel (0) target = $region13
    $region12: #{simple_gpt_forward.1} parent=1 // pred_region
      %315 = vsyncadd [#allocation3], 0
      %s316 = sshll.u32 [#allocation2], 4
      %s317 = int_to_ptr.vmem [resolvable:$true] %s316
      %s318 = sshll.u32 %s2, 4
      %s319 = int_to_ptr.hbm [resolvable:$true] %s318
      %324 = dma.vmem_to_hbm [thread:$0]  %s317, 2048, %s319, [#allocation3], 512, 512, 32
    $region13: #{simple_gpt_forward.1} parent=1 // pred_fallthru
      _
    // Predicated region
    $region14: #{simple_gpt_forward.1} parent=1 // pred_check
      _
    $region15: #{simple_gpt_forward.1} parent=1 // pred_check_branch
      %326 = sbr.rel (0) target = $region17
    $region16: #{simple_gpt_forward.1} parent=1 // pred_region
      %328 = dma.done [#allocation3], 2048
    $region17: #{simple_gpt_forward.1} parent=1 // pred_fallthru
      _
    %329 = vsyncpa [#allocation3], 1

</llo_original>
